<compile_context>
chip_gen: v6e
topology: v6e:2x2x1
jax: 0.10.0
libtpu: 0.0.40
codegen_flags: <defaults>
</compile_context>

<pallas_src>
import functools
import math

import numpy as np
import jax
import jax.numpy as jnp
from jax.experimental import pallas as pl
from jax.experimental.pallas import tpu as pltpu

_VMEM_LIMIT = 32 * 1024 * 1024   # harmless no-op at these sizes; safe on v7x (64 MiB physical)


# ----------------------------------------------------------------------------
# Host-side (numpy, float64) construction of the exact linear operators
# ----------------------------------------------------------------------------
def _gaussian_1d(scale):
    # Matches AntiAliasInterpolation2d.__init__ (separable factor, normalized).
    sigma = (1.0 / scale - 1.0) / 2.0
    ksize = 2 * round(sigma * 4) + 1
    mean = (ksize - 1) / 2.0
    xs = np.arange(ksize, dtype=np.float64)
    g = np.exp(-((xs - mean) ** 2) / (2.0 * sigma ** 2))
    return g / g.sum()


def _blur_matrix(size, g):
    # Banded matrix implementing 1-D "same" convolution with zero padding K//2
    # (equivalent to F.pad(..., ka/kb) + valid conv in the reference; K is odd).
    K = g.shape[0]
    pad = K // 2
    B = np.zeros((size, size), dtype=np.float64)
    for i in range(size):
        for a in range(K):
            r = i + a - pad
            if 0 <= r < size:
                B[i, r] += g[a]
    return B


def _resize_matrix(in_size, out_size):
    # Bilinear interpolation matrix, align_corners=True (PyTorch F.interpolate).
    R = np.zeros((out_size, in_size), dtype=np.float64)
    ratio = (in_size - 1) / (out_size - 1) if out_size > 1 else 0.0
    for o in range(out_size):
        src = ratio * o
        i0 = min(max(int(np.floor(src)), 0), in_size - 1)
        i1 = min(i0 + 1, in_size - 1)
        w = src - i0
        R[o, i0] += 1.0 - w
        R[o, i1] += w
    return R


# ----------------------------------------------------------------------------
# Pallas kernel: all scales fused; two MXU matmuls per scale on a shared slab
# ----------------------------------------------------------------------------
def _make_pyramid_kernel(n_scales):
    def kernel(*refs):
        x_ref = refs[0]
        bt_refs = refs[1:1 + n_scales]
        a_refs = refs[1 + n_scales:1 + 2 * n_scales]
        out_refs = refs[1 + 2 * n_scales:]
        x = x_ref[...]                                   # (H, N*C*W), loaded into vregs once
        for s in range(n_scales):
            # column operator (plane-blockdiag): (H, N*C*W) @ (N*C*W, N*C*Wo) -> (H, N*C*Wo)
            y = jnp.dot(x, bt_refs[s][...], preferred_element_type=jnp.float32)
            # row operator (dense):              (Ho, H) @ (H, N*C*Wo) -> (Ho, N*C*Wo)
            out_refs[s][...] = jnp.dot(a_refs[s][...], y,
                                       preferred_element_type=jnp.float32)
    return kernel


@functools.lru_cache(maxsize=None)
def _build_pyramid_fn(shape, scales):
    """Build once per (shape, scales): constants on device + jitted fused forward."""
    N, C, H, W = shape
    P = N * C
    out_hw = []
    a_mats, bt_mats = [], []
    for s in scales:
        Ho = int(math.floor(H * s))
        Wo = int(math.floor(W * s))
        out_hw.append((Ho, Wo))
        g = _gaussian_1d(s)
        A = _resize_matrix(H, Ho) @ _blur_matrix(H, g)             # (Ho, H) dense row op
        Bm = _resize_matrix(W, Wo) @ _blur_matrix(W, g)            # (Wo, W)
        # Per-plane column op with planes merged into the lane dim is inherently
        # block-diagonal: (P*W, P*Wo).  Tiny (~130 KiB total) at these sizes.
        bt_big = np.kron(np.eye(P), np.ascontiguousarray(Bm.T))
        a_mats.append(jnp.asarray(A, jnp.float32))
        bt_mats.append(jnp.asarray(bt_big, jnp.float32))

    n_scales = len(scales)
    kernel = _make_pyramid_kernel(n_scales)

    in_specs = [pl.BlockSpec((H, P * W), lambda i: (0, 0))]
    in_specs += [pl.BlockSpec((P * W, P * wo), lambda i: (0, 0)) for (_, wo) in out_hw]
    in_specs += [pl.BlockSpec((ho, H), lambda i: (0, 0)) for (ho, _) in out_hw]
    out_specs = [pl.BlockSpec((ho, P * wo), lambda i: (0, 0)) for (ho, wo) in out_hw]
    out_shape = tuple(jax.ShapeDtypeStruct((ho, P * wo), jnp.float32) for (ho, wo) in out_hw)

    pyramid_call = pl.pallas_call(
        kernel,
        out_shape=out_shape,
        grid=(1,),
        in_specs=in_specs,
        out_specs=out_specs,
        compiler_params=pltpu.CompilerParams(
            dimension_semantics=("arbitrary",),
            vmem_limit_bytes=_VMEM_LIMIT),
    )

    def forward(x):
        x = x.astype(jnp.float32)
        # H-major slab shared by every scale: (N, C, H, W) -> (H, N*C*W).
        x_slab = jnp.transpose(x, (2, 0, 1, 3)).reshape(H, P * W)
        outs = pyramid_call(x_slab, *bt_mats, *a_mats)
        results = []
        for (ho, wo), o in zip(out_hw, outs):
            # (Ho, N*C*Wo) -> (N, C, Ho, Wo)
            results.append(jnp.transpose(o.reshape(ho, N, C, wo), (1, 2, 0, 3)))
        return tuple(results)

    return jax.jit(forward)


def image_pyramide(x, scales):
    """Mirrors ImagePyramide.forward: dict of per-scale anti-aliased downsamples."""
    scales = list(scales)
    sub_scales = tuple(float(s) for s in scales if float(s) != 1.0)
    sub_outs = ()
    if sub_scales:
        fwd = _build_pyramid_fn(tuple(int(d) for d in x.shape), sub_scales)
        sub_outs = fwd(x)
    out_dict = {}
    it = iter(sub_outs)
    for s in scales:
        key = 'prediction_' + str(s).replace('.', '-').replace('-', '.')
        out_dict[key] = x if float(s) == 1.0 else next(it)   # scale==1 returns input unchanged
    return out_dict


if __name__ == "__main__":
    key = jax.random.PRNGKey(0)
    # NCHW input, matching the PyTorch API: batch=2, num_channels=3, 32x32 frames.
    x = jax.random.uniform(key, (2, 3, 32, 32), jnp.float32)
    scales = [1.0, 0.5, 0.25, 0.125]

    pyr = image_pyramide(x, scales)
    for v in pyr.values():
        jax.block_until_ready(v)

    assert pyr['prediction_1.0'].shape == (2, 3, 32, 32)
    assert pyr['prediction_0.5'].shape == (2, 3, 16, 16)
    assert pyr['prediction_0.25'].shape == (2, 3, 8, 8)
    assert pyr['prediction_0.125'].shape == (2, 3, 4, 4)
    print("KERNEL_OK")
</pallas_src>

<mosaic_0001>
module attributes {stable_mosaic.version = 11 : i64} {
  func.func @kernel(%arg0: i32, %arg1: memref<32x192xf32, #tpu.memory_space<vmem>>, %arg2: memref<192x96xf32, #tpu.memory_space<vmem>>, %arg3: memref<192x48xf32, #tpu.memory_space<vmem>>, %arg4: memref<192x24xf32, #tpu.memory_space<vmem>>, %arg5: memref<16x32xf32, #tpu.memory_space<vmem>>, %arg6: memref<8x32xf32, #tpu.memory_space<vmem>>, %arg7: memref<4x32xf32, #tpu.memory_space<vmem>>, %arg8: memref<16x96xf32, #tpu.memory_space<vmem>>, %arg9: memref<8x48xf32, #tpu.memory_space<vmem>>, %arg10: memref<4x24xf32, #tpu.memory_space<vmem>>) attributes {dimension_semantics = [#tpu.dimension_semantics<arbitrary>], iteration_bounds = array<i64: 1>, scalar_prefetch = 0 : i64, scratch_operands = 0 : i64, tpu.core_type = #tpu.core_type<tc>, window_params = [{pipeline_mode = #tpu.pipeline_mode<synchronous>, transform_indices = @transform_0, window_bounds = array<i64: 32, 192>}, {pipeline_mode = #tpu.pipeline_mode<synchronous>, transform_indices = @transform_1, window_bounds = array<i64: 192, 96>}, {pipeline_mode = #tpu.pipeline_mode<synchronous>, transform_indices = @transform_2, window_bounds = array<i64: 192, 48>}, {pipeline_mode = #tpu.pipeline_mode<synchronous>, transform_indices = @transform_3, window_bounds = array<i64: 192, 24>}, {pipeline_mode = #tpu.pipeline_mode<synchronous>, transform_indices = @transform_4, window_bounds = array<i64: 16, 32>}, {pipeline_mode = #tpu.pipeline_mode<synchronous>, transform_indices = @transform_5, window_bounds = array<i64: 8, 32>}, {pipeline_mode = #tpu.pipeline_mode<synchronous>, transform_indices = @transform_6, window_bounds = array<i64: 4, 32>}, {pipeline_mode = #tpu.pipeline_mode<synchronous>, transform_indices = @transform_7, window_bounds = array<i64: 16, 96>}, {pipeline_mode = #tpu.pipeline_mode<synchronous>, transform_indices = @transform_8, window_bounds = array<i64: 8, 48>}, {pipeline_mode = #tpu.pipeline_mode<synchronous>, transform_indices = @transform_9, window_bounds = array<i64: 4, 24>}]} {
    %c0 = arith.constant 0 : index
    %c0_0 = arith.constant 0 : index
    %0 = vector.load %arg1[%c0, %c0_0] : memref<32x192xf32, #tpu.memory_space<vmem>>, vector<32x192xf32>
    %c0_1 = arith.constant 0 : index
    %c0_2 = arith.constant 0 : index
    %1 = vector.load %arg2[%c0_1, %c0_2] : memref<192x96xf32, #tpu.memory_space<vmem>>, vector<192x96xf32>
    %cst = arith.constant dense<0.000000e+00> : vector<32x96xf32>
    %2 = tpu.matmul %0, %1, %cst {dimension_numbers = #tpu.dot_dimension_numbers<[1], [0], [0], [1], [0, 0, 1, 1], [], []>} : vector<32x192xf32>, vector<192x96xf32>, vector<32x96xf32> -> vector<32x96xf32>
    %c0_3 = arith.constant 0 : index
    %c0_4 = arith.constant 0 : index
    %3 = vector.load %arg5[%c0_3, %c0_4] : memref<16x32xf32, #tpu.memory_space<vmem>>, vector<16x32xf32>
    %cst_5 = arith.constant dense<0.000000e+00> : vector<16x96xf32>
    %4 = tpu.matmul %3, %2, %cst_5 {dimension_numbers = #tpu.dot_dimension_numbers<[1], [0], [0], [1], [0, 0, 1, 1], [], []>} : vector<16x32xf32>, vector<32x96xf32>, vector<16x96xf32> -> vector<16x96xf32>
    %c0_6 = arith.constant 0 : index
    %c0_7 = arith.constant 0 : index
    %5 = vector.load %arg8[%c0_6, %c0_7] : memref<16x96xf32, #tpu.memory_space<vmem>>, vector<16x96xf32>
    tpu.vector_store %arg8[%c0_6, %c0_7], %4 {strides = array<i32>} : memref<16x96xf32, #tpu.memory_space<vmem>>, vector<16x96xf32>,
    %c0_8 = arith.constant 0 : index
    %c0_9 = arith.constant 0 : index
    %6 = vector.load %arg3[%c0_8, %c0_9] : memref<192x48xf32, #tpu.memory_space<vmem>>, vector<192x48xf32>
    %cst_10 = arith.constant dense<0.000000e+00> : vector<32x48xf32>
    %7 = tpu.matmul %0, %6, %cst_10 {dimension_numbers = #tpu.dot_dimension_numbers<[1], [0], [0], [1], [0, 0, 1, 1], [], []>} : vector<32x192xf32>, vector<192x48xf32>, vector<32x48xf32> -> vector<32x48xf32>
    %c0_11 = arith.constant 0 : index
    %c0_12 = arith.constant 0 : index
    %8 = vector.load %arg6[%c0_11, %c0_12] : memref<8x32xf32, #tpu.memory_space<vmem>>, vector<8x32xf32>
    %cst_13 = arith.constant dense<0.000000e+00> : vector<8x48xf32>
    %9 = tpu.matmul %8, %7, %cst_13 {dimension_numbers = #tpu.dot_dimension_numbers<[1], [0], [0], [1], [0, 0, 1, 1], [], []>} : vector<8x32xf32>, vector<32x48xf32>, vector<8x48xf32> -> vector<8x48xf32>
    %c0_14 = arith.constant 0 : index
    %c0_15 = arith.constant 0 : index
    %10 = vector.load %arg9[%c0_14, %c0_15] : memref<8x48xf32, #tpu.memory_space<vmem>>, vector<8x48xf32>
    tpu.vector_store %arg9[%c0_14, %c0_15], %9 {strides = array<i32>} : memref<8x48xf32, #tpu.memory_space<vmem>>, vector<8x48xf32>,
    %c0_16 = arith.constant 0 : index
    %c0_17 = arith.constant 0 : index
    %11 = vector.load %arg4[%c0_16, %c0_17] : memref<192x24xf32, #tpu.memory_space<vmem>>, vector<192x24xf32>
    %cst_18 = arith.constant dense<0.000000e+00> : vector<32x24xf32>
    %12 = tpu.matmul %0, %11, %cst_18 {dimension_numbers = #tpu.dot_dimension_numbers<[1], [0], [0], [1], [0, 0, 1, 1], [], []>} : vector<32x192xf32>, vector<192x24xf32>, vector<32x24xf32> -> vector<32x24xf32>
    %c0_19 = arith.constant 0 : index
    %c0_20 = arith.constant 0 : index
    %13 = vector.load %arg7[%c0_19, %c0_20] : memref<4x32xf32, #tpu.memory_space<vmem>>, vector<4x32xf32>
    %cst_21 = arith.constant dense<0.000000e+00> : vector<4x24xf32>
    %14 = tpu.matmul %13, %12, %cst_21 {dimension_numbers = #tpu.dot_dimension_numbers<[1], [0], [0], [1], [0, 0, 1, 1], [], []>} : vector<4x32xf32>, vector<32x24xf32>, vector<4x24xf32> -> vector<4x24xf32>
    %c0_22 = arith.constant 0 : index
    %c0_23 = arith.constant 0 : index
    %15 = vector.load %arg10[%c0_22, %c0_23] : memref<4x24xf32, #tpu.memory_space<vmem>>, vector<4x24xf32>
    tpu.vector_store %arg10[%c0_22, %c0_23], %14 {strides = array<i32>} : memref<4x24xf32, #tpu.memory_space<vmem>>, vector<4x24xf32>,
    return
  }
  func.func @transform_0(%arg0: i32) -> (i32, i32) {
    %c0_i32 = arith.constant 0 : i32
    %c0_i32_0 = arith.constant 0 : i32
    %c0_i32_1 = arith.constant 0 : i32
    return %c0_i32, %c0_i32_0 : i32, i32
  }
  func.func @transform_1(%arg0: i32) -> (i32, i32) {
    %c0_i32 = arith.constant 0 : i32
    %c0_i32_0 = arith.constant 0 : i32
    %c0_i32_1 = arith.constant 0 : i32
    return %c0_i32, %c0_i32_0 : i32, i32
  }
  func.func @transform_2(%arg0: i32) -> (i32, i32) {
    %c0_i32 = arith.constant 0 : i32
    %c0_i32_0 = arith.constant 0 : i32
    %c0_i32_1 = arith.constant 0 : i32
    return %c0_i32, %c0_i32_0 : i32, i32
  }
  func.func @transform_3(%arg0: i32) -> (i32, i32) {
    %c0_i32 = arith.constant 0 : i32
    %c0_i32_0 = arith.constant 0 : i32
    %c0_i32_1 = arith.constant 0 : i32
    return %c0_i32, %c0_i32_0 : i32, i32
  }
  func.func @transform_4(%arg0: i32) -> (i32, i32) {
    %c0_i32 = arith.constant 0 : i32
    %c0_i32_0 = arith.constant 0 : i32
    %c0_i32_1 = arith.constant 0 : i32
    return %c0_i32, %c0_i32_0 : i32, i32
  }
  func.func @transform_5(%arg0: i32) -> (i32, i32) {
    %c0_i32 = arith.constant 0 : i32
    %c0_i32_0 = arith.constant 0 : i32
    %c0_i32_1 = arith.constant 0 : i32
    return %c0_i32, %c0_i32_0 : i32, i32
  }
  func.func @transform_6(%arg0: i32) -> (i32, i32) {
    %c0_i32 = arith.constant 0 : i32
    %c0_i32_0 = arith.constant 0 : i32
    %c0_i32_1 = arith.constant 0 : i32
    return %c0_i32, %c0_i32_0 : i32, i32
  }
  func.func @transform_7(%arg0: i32) -> (i32, i32) {
    %c0_i32 = arith.constant 0 : i32
    %c0_i32_0 = arith.constant 0 : i32
    %c0_i32_1 = arith.constant 0 : i32
    return %c0_i32, %c0_i32_0 : i32, i32
  }
  func.func @transform_8(%arg0: i32) -> (i32, i32) {
    %c0_i32 = arith.constant 0 : i32
    %c0_i32_0 = arith.constant 0 : i32
    %c0_i32_1 = arith.constant 0 : i32
    return %c0_i32, %c0_i32_0 : i32, i32
  }
  func.func @transform_9(%arg0: i32) -> (i32, i32) {
    %c0_i32 = arith.constant 0 : i32
    %c0_i32_0 = arith.constant 0 : i32
    %c0_i32_1 = arith.constant 0 : i32
    return %c0_i32, %c0_i32_0 : i32, i32
  }
}

</mosaic_0001>

<llo_original>
// kernel: forward.1
$region0: #{forward.1}
  #allocation0 [shape = 'u32[]', space=smem, size = 0x4, offset = 0x4, fixed_abs, tag = 'smem constant byte address 0x4 - core index']
  #allocation1 [shape = 'u32[144,128]{1,0:T(1,128)}', space=vmem, size = 0x12000, scoped, tag = 'internal scratch']
  %s0 = inlined_call_operand.vmem [shape: f32[32,192], index: 0, kind: input, shape index: {}]
  %s1 = inlined_call_operand.vmem [shape: f32[192,96], index: 1, kind: input, shape index: {}]
  %s2 = inlined_call_operand.vmem [shape: f32[192,48], index: 2, kind: input, shape index: {}]
  %s3 = inlined_call_operand.vmem [shape: f32[192,24], index: 3, kind: input, shape index: {}]
  %s4 = inlined_call_operand.vmem [shape: f32[16,32], index: 4, kind: input, shape index: {}]
  %s5 = inlined_call_operand.vmem [shape: f32[8,32], index: 5, kind: input, shape index: {}]
  %s6 = inlined_call_operand.vmem [shape: f32[4,32], index: 6, kind: input, shape index: {}]
  %s7 = inlined_call_operand.vmem [shape: f32[16,96], index: 7, kind: output, shape index: {0}]
  %s8 = inlined_call_operand.vmem [shape: f32[8,48], index: 8, kind: output, shape index: {1}]
  %s9 = inlined_call_operand.vmem [shape: f32[4,24], index: 9, kind: output, shape index: {2}]
  %10 = xla_tuple %s7, %s8, %s9
  %s11 = sld [smem:[#allocation0]]
  $region54: #{forward.1} parent=0
    _
  %s13 = ssub.s32 1, %s11
  %s14 = scalar_select 0, %s13, %s11
  // Predicated region
  $region2: #{forward.1} parent=0 // pred_check
    _
  $region3: #{forward.1} parent=0 // pred_check_branch
    %16 = sbr.rel (0) target = $region5
  $region4: #{forward.1} parent=0 // pred_region
    _
  $region5: #{forward.1} parent=0 // pred_fallthru
    _
  // Predicated region
  $region6: #{forward.1} parent=0 // pred_check
    _
  $region7: #{forward.1} parent=0 // pred_check_branch
    %18 = sbr.rel (0) target = $region9
  $region8: #{forward.1} parent=0 // pred_region
    _
  $region9: #{forward.1} parent=0 // pred_fallthru
    _
  // Predicated region
  $region10: #{forward.1} parent=0 // pred_check
    _
  $region11: #{forward.1} parent=0 // pred_check_branch
    %20 = sbr.rel (0) target = $region13
  $region12: #{forward.1} parent=0 // pred_region
    _
  $region13: #{forward.1} parent=0 // pred_fallthru
    _
  // Predicated region
  $region14: #{forward.1} parent=0 // pred_check
    _
  $region15: #{forward.1} parent=0 // pred_check_branch
    %22 = sbr.rel (0) target = $region17
  $region16: #{forward.1} parent=0 // pred_region
    _
  $region17: #{forward.1} parent=0 // pred_fallthru
    _
  // Predicated region
  $region18: #{forward.1} parent=0 // pred_check
    _
  $region19: #{forward.1} parent=0 // pred_check_branch
    %24 = sbr.rel (0) target = $region21
  $region20: #{forward.1} parent=0 // pred_region
    _
  $region21: #{forward.1} parent=0 // pred_fallthru
    _
  // Predicated region
  $region22: #{forward.1} parent=0 // pred_check
    _
  $region23: #{forward.1} parent=0 // pred_check_branch
    %26 = sbr.rel (0) target = $region25
  $region24: #{forward.1} parent=0 // pred_region
    _
  $region25: #{forward.1} parent=0 // pred_fallthru
    _
  // Predicated region
  $region26: #{forward.1} parent=0 // pred_check
    _
  $region27: #{forward.1} parent=0 // pred_check_branch
    %28 = sbr.rel (0) target = $region29
  $region28: #{forward.1} parent=0 // pred_region
    _
  $region29: #{forward.1} parent=0 // pred_fallthru
    _
  %v29 = vld [vmem:[%s0] sm:$0xff]
  %v30 = vld [vmem:[%s0 + $0x8] sm:$0xff]
  %v31 = vld [vmem:[%s0 + $0x10] sm:$0xff]
  %v32 = vld [vmem:[%s0 + $0x18] sm:$0xff]
  %v33 = vld [vmem:[%s0 + $0x20] sm:$0xff]
  %v34 = vld [vmem:[%s0 + $0x28] sm:$0xff]
  %v35 = vld [vmem:[%s0 + $0x30] sm:$0xff]
  %v36 = vld [vmem:[%s0 + $0x38] sm:$0xff]
  %v37 = vld [vmem:[%s1] sm:$0xff]
  %v38 = vld [vmem:[%s1 + $0x8] sm:$0xff]
  %v39 = vld [vmem:[%s1 + $0x10] sm:$0xff]
  %v40 = vld [vmem:[%s1 + $0x18] sm:$0xff]
  %v41 = vld [vmem:[%s1 + $0x20] sm:$0xff]
  %v42 = vld [vmem:[%s1 + $0x28] sm:$0xff]
  %v43 = vld [vmem:[%s1 + $0x30] sm:$0xff]
  %v44 = vld [vmem:[%s1 + $0x38] sm:$0xff]
  %v45 = vld [vmem:[%s1 + $0x40] sm:$0xff]
  %v46 = vld [vmem:[%s1 + $0x48] sm:$0xff]
  %v47 = vld [vmem:[%s1 + $0x50] sm:$0xff]
  %v48 = vld [vmem:[%s1 + $0x58] sm:$0xff]
  %v49 = vld [vmem:[%s1 + $0x60] sm:$0xff]
  %v50 = vld [vmem:[%s1 + $0x68] sm:$0xff]
  %v51 = vld [vmem:[%s1 + $0x70] sm:$0xff]
  %v52 = vld [vmem:[%s1 + $0x78] sm:$0xff]
  %v53 = vld [vmem:[%s1 + $0x80] sm:$0xff]
  %v54 = vld [vmem:[%s1 + $0x88] sm:$0xff]
  %v55 = vld [vmem:[%s1 + $0x90] sm:$0xff]
  %v56 = vld [vmem:[%s1 + $0x98] sm:$0xff]
  %v57 = vld [vmem:[%s1 + $0xa0] sm:$0xff]
  %v58 = vld [vmem:[%s1 + $0xa8] sm:$0xff]
  %v59 = vld [vmem:[%s1 + $0xb0] sm:$0xff]
  %v60 = vld [vmem:[%s1 + $0xb8] sm:$0xff]
  %vm61 = vcmask 523264
  %v63 = vsel %vm61, %v30, 0
  %v66 = vsel %vm61, %v32, 0
  %v69 = vsel %vm61, %v34, 0
  %v72 = vsel %vm61, %v36, 0
  %74 = vmatprep.subr.mxu0 0.0
  %75 = vmatpush1.msra.mxu0 %v52
  %76 = vmatprep.subr.mxu0 0.0
  %77 = vmatpush1.msra.mxu0 %v51
  %78 = vmatprep.subr.mxu0 0.0
  %79 = vmatpush1.msra.mxu0 %v50
  %80 = vmatprep.subr.mxu0 0.0
  %81 = vmatpush1.msra.mxu0 %v49
  %82 = vmatprep.subr.mxu0 0.0
  %83 = vmatpush1.msra.mxu0 %v48
  %84 = vmatprep.subr.mxu0 0.0
  %85 = vmatpush1.msra.mxu0 %v47
  %86 = vmatprep.subr.mxu0 0.0
  %87 = vmatpush1.msra.mxu0 %v46
  %88 = vmatprep.subr.mxu0 0.0
  %89 = vmatpush1.msra.mxu0 %v45
  %90 = vmatprep.subr.mxu0 0.0
  %91 = vmatpush1.msra.mxu0 %v44
  %92 = vmatprep.subr.mxu0 0.0
  %93 = vmatpush1.msra.mxu0 %v43
  %94 = vmatprep.subr.mxu0 0.0
  %95 = vmatpush1.msra.mxu0 %v42
  %96 = vmatprep.subr.mxu0 0.0
  %97 = vmatpush1.msra.mxu0 %v41
  %98 = vmatprep.subr.mxu0 0.0
  %99 = vmatpush1.msra.mxu0 %v40
  %100 = vmatprep.subr.mxu0 0.0
  %101 = vmatpush1.msra.mxu0 %v39
  %102 = vmatprep.subr.mxu0 0.0
  %103 = vmatpush1.msra.mxu0 %v38
  %104 = vmatprep.subr.mxu0 0.0
  %105 = vmatpush1.msra.mxu0 %v37
  %106 = vmatprep.subr.mxu0 0.0
  %107 = vmatpush2.msra.mxu0 0.0
  %108 = vmatprep.subr.mxu0 0.0
  %109 = vmatpush2.msra.mxu0 0.0
  %110 = vmatprep.subr.mxu0 0.0
  %111 = vmatpush2.msra.mxu0 0.0
  %112 = vmatprep.subr.mxu0 0.0
  %113 = vmatpush2.msra.mxu0 0.0
  %114 = vmatprep.subr.mxu0 0.0
  %115 = vmatpush2.msra.mxu0 0.0
  %116 = vmatprep.subr.mxu0 0.0
  %117 = vmatpush2.msra.mxu0 0.0
  %118 = vmatprep.subr.mxu0 0.0
  %119 = vmatpush2.msra.mxu0 0.0
  %120 = vmatprep.subr.mxu0 0.0
  %121 = vmatpush2.msra.mxu0 0.0
  %122 = vmatprep.subr.mxu0 0.0
  %123 = vmatpush2.msra.mxu0 %v60
  %124 = vmatprep.subr.mxu0 0.0
  %125 = vmatpush2.msra.mxu0 %v59
  %126 = vmatprep.subr.mxu0 0.0
  %127 = vmatpush2.msra.mxu0 %v58
  %128 = vmatprep.subr.mxu0 0.0
  %129 = vmatpush2.msra.mxu0 %v57
  %130 = vmatprep.subr.mxu0 0.0
  %131 = vmatpush2.msra.mxu0 %v56
  %132 = vmatprep.subr.mxu0 0.0
  %133 = vmatpush2.msra.mxu0 %v55
  %134 = vmatprep.subr.mxu0 0.0
  %135 = vmatpush2.msra.mxu0 %v54
  %136 = vmatprep.subr.mxu0 0.0
  %137 = vmatpush2.msra.mxu0 %v53
  %138 = vmatprep.mubr.f32.mxu0 %v63
  %139 = vmatmul.mubr.f32.gmra.mxu0 %v29
  %v140 = vpop.f32.mrf.mxu0
  %v141 = vadd.f32 0.0, %v140
  %v142 = vpop.f32.mrf.mxu0
  %143 = vmatprep.mubr.f32.mxu0 %v66
  %144 = vmatmul.mubr.f32.gmra.mxu0 %v31
  %v145 = vpop.f32.mrf.mxu0
  %v146 = vadd.f32 0.0, %v145
  %v147 = vpop.f32.mrf.mxu0
  %148 = vmatprep.mubr.f32.mxu0 %v69
  %149 = vmatmul.mubr.f32.gmra.mxu0 %v33
  %v150 = vpop.f32.mrf.mxu0
  %v151 = vadd.f32 0.0, %v150
  %v152 = vpop.f32.mrf.mxu0
  %153 = vmatprep.mubr.f32.mxu0 %v72
  %154 = vmatmul.mubr.f32.gmra.mxu0 %v35
  %v155 = vpop.f32.mrf.mxu0
  %v156 = vadd.f32 0.0, %v155
  %v157 = vpop.f32.mrf.mxu0
  %158 = vdwg.mxu0
  %v159 = vld [vmem:[%s4] sm:$0xff]
  %v160 = vld [vmem:[%s4 + $0x8] sm:$0xff]
  %vm161 = vcmask 261120
  %v163 = vsel %vm161, %v159, 0
  %v166 = vsel %vm161, %v160, 0
  %168 = vmatprep.subr.mxu0 0.0
  %169 = vmatpush1.msra.mxu0 0.0
  %170 = vmatprep.subr.mxu0 0.0
  %171 = vmatpush1.msra.mxu0 0.0
  %172 = vmatprep.subr.mxu0 0.0
  %173 = vmatpush1.msra.mxu0 0.0
  %174 = vmatprep.subr.mxu0 0.0
  %175 = vmatpush1.msra.mxu0 0.0
  %176 = vmatprep.subr.mxu0 0.0
  %177 = vmatpush1.msra.mxu0 0.0
  %178 = vmatprep.subr.mxu0 0.0
  %179 = vmatpush1.msra.mxu0 0.0
  %180 = vmatprep.subr.mxu0 0.0
  %181 = vmatpush1.msra.mxu0 0.0
  %182 = vmatprep.subr.mxu0 0.0
  %183 = vmatpush1.msra.mxu0 0.0
  %184 = vmatprep.subr.mxu0 0.0
  %185 = vmatpush1.msra.mxu0 0.0
  %186 = vmatprep.subr.mxu0 0.0
  %187 = vmatpush1.msra.mxu0 0.0
  %188 = vmatprep.subr.mxu0 0.0
  %189 = vmatpush1.msra.mxu0 0.0
  %190 = vmatprep.subr.mxu0 0.0
  %191 = vmatpush1.msra.mxu0 0.0
  %192 = vmatprep.subr.mxu0 0.0
  %193 = vmatpush1.msra.mxu0 %v156
  %194 = vmatprep.subr.mxu0 0.0
  %195 = vmatpush1.msra.mxu0 %v151
  %196 = vmatprep.subr.mxu0 0.0
  %197 = vmatpush1.msra.mxu0 %v146
  %198 = vmatprep.subr.mxu0 0.0
  %199 = vmatpush1.msra.mxu0 %v141
  %200 = vmatprep.subr.mxu0 0.0
  %201 = vmatpush2.msra.mxu0 0.0
  %202 = vmatprep.subr.mxu0 0.0
  %203 = vmatpush2.msra.mxu0 0.0
  %204 = vmatprep.subr.mxu0 0.0
  %205 = vmatpush2.msra.mxu0 0.0
  %206 = vmatprep.subr.mxu0 0.0
  %207 = vmatpush2.msra.mxu0 0.0
  %208 = vmatprep.subr.mxu0 0.0
  %209 = vmatpush2.msra.mxu0 0.0
  %210 = vmatprep.subr.mxu0 0.0
  %211 = vmatpush2.msra.mxu0 0.0
  %212 = vmatprep.subr.mxu0 0.0
  %213 = vmatpush2.msra.mxu0 0.0
  %214 = vmatprep.subr.mxu0 0.0
  %215 = vmatpush2.msra.mxu0 0.0
  %216 = vmatprep.subr.mxu0 0.0
  %217 = vmatpush2.msra.mxu0 0.0
  %218 = vmatprep.subr.mxu0 0.0
  %219 = vmatpush2.msra.mxu0 0.0
  %220 = vmatprep.subr.mxu0 0.0
  %221 = vmatpush2.msra.mxu0 0.0
  %222 = vmatprep.subr.mxu0 0.0
  %223 = vmatpush2.msra.mxu0 0.0
  %224 = vmatprep.subr.mxu0 0.0
  %225 = vmatpush2.msra.mxu0 0.0
  %226 = vmatprep.subr.mxu0 0.0
  %227 = vmatpush2.msra.mxu0 0.0
  %228 = vmatprep.subr.mxu0 0.0
  %229 = vmatpush2.msra.mxu0 0.0
  %230 = vmatprep.subr.mxu0 0.0
  %231 = vmatpush2.msra.mxu0 0.0
  %232 = vmatprep.mubr.f32.mxu0 0.0
  %233 = vmatmul.mubr.f32.gmra.mxu0 %v163
  %v234 = vpop.f32.mrf.mxu0
  %v235 = vadd.f32 0.0, %v234
  %v236 = vpop.f32.mrf.mxu0
  %237 = vmatprep.mubr.f32.mxu0 0.0
  %238 = vmatmul.mubr.f32.gmra.mxu0 %v166
  %v239 = vpop.f32.mrf.mxu0
  %v240 = vadd.f32 0.0, %v239
  %v241 = vpop.f32.mrf.mxu0
  %242 = vdwg.mxu0
  %vm243 = vcmask 785408
  %244 = vst.msk [vmem:[%s7] sm:$0xff] %vm243, %v235
  %245 = vst.msk [vmem:[%s7 + $0x8] sm:$0xff] %vm243, %v240
  %v246 = vld [vmem:[%s2] sm:$0xff]
  %v247 = vld [vmem:[%s2 + $0x8] sm:$0xff]
  %v248 = vld [vmem:[%s2 + $0x10] sm:$0xff]
  %v249 = vld [vmem:[%s2 + $0x18] sm:$0xff]
  %v250 = vld [vmem:[%s2 + $0x20] sm:$0xff]
  %v251 = vld [vmem:[%s2 + $0x28] sm:$0xff]
  %v252 = vld [vmem:[%s2 + $0x30] sm:$0xff]
  %v253 = vld [vmem:[%s2 + $0x38] sm:$0xff]
  %v254 = vld [vmem:[%s2 + $0x40] sm:$0xff]
  %v255 = vld [vmem:[%s2 + $0x48] sm:$0xff]
  %v256 = vld [vmem:[%s2 + $0x50] sm:$0xff]
  %v257 = vld [vmem:[%s2 + $0x58] sm:$0xff]
  %v258 = vld [vmem:[%s2 + $0x60] sm:$0xff]
  %v259 = vld [vmem:[%s2 + $0x68] sm:$0xff]
  %v260 = vld [vmem:[%s2 + $0x70] sm:$0xff]
  %v261 = vld [vmem:[%s2 + $0x78] sm:$0xff]
  %v262 = vld [vmem:[%s2 + $0x80] sm:$0xff]
  %v263 = vld [vmem:[%s2 + $0x88] sm:$0xff]
  %v264 = vld [vmem:[%s2 + $0x90] sm:$0xff]
  %v265 = vld [vmem:[%s2 + $0x98] sm:$0xff]
  %v266 = vld [vmem:[%s2 + $0xa0] sm:$0xff]
  %v267 = vld [vmem:[%s2 + $0xa8] sm:$0xff]
  %v268 = vld [vmem:[%s2 + $0xb0] sm:$0xff]
  %v269 = vld [vmem:[%s2 + $0xb8] sm:$0xff]
  %270 = vmatprep.subr.mxu0 0.0
  %271 = vmatpush1.msra.mxu0 %v261
  %272 = vmatprep.subr.mxu0 0.0
  %273 = vmatpush1.msra.mxu0 %v260
  %274 = vmatprep.subr.mxu0 0.0
  %275 = vmatpush1.msra.mxu0 %v259
  %276 = vmatprep.subr.mxu0 0.0
  %277 = vmatpush1.msra.mxu0 %v258
  %278 = vmatprep.subr.mxu0 0.0
  %279 = vmatpush1.msra.mxu0 %v257
  %280 = vmatprep.subr.mxu0 0.0
  %281 = vmatpush1.msra.mxu0 %v256
  %282 = vmatprep.subr.mxu0 0.0
  %283 = vmatpush1.msra.mxu0 %v255
  %284 = vmatprep.subr.mxu0 0.0
  %285 = vmatpush1.msra.mxu0 %v254
  %286 = vmatprep.subr.mxu0 0.0
  %287 = vmatpush1.msra.mxu0 %v253
  %288 = vmatprep.subr.mxu0 0.0
  %289 = vmatpush1.msra.mxu0 %v252
  %290 = vmatprep.subr.mxu0 0.0
  %291 = vmatpush1.msra.mxu0 %v251
  %292 = vmatprep.subr.mxu0 0.0
  %293 = vmatpush1.msra.mxu0 %v250
  %294 = vmatprep.subr.mxu0 0.0
  %295 = vmatpush1.msra.mxu0 %v249
  %296 = vmatprep.subr.mxu0 0.0
  %297 = vmatpush1.msra.mxu0 %v248
  %298 = vmatprep.subr.mxu0 0.0
  %299 = vmatpush1.msra.mxu0 %v247
  %300 = vmatprep.subr.mxu0 0.0
  %301 = vmatpush1.msra.mxu0 %v246
  %302 = vmatprep.subr.mxu0 0.0
  %303 = vmatpush2.msra.mxu0 0.0
  %304 = vmatprep.subr.mxu0 0.0
  %305 = vmatpush2.msra.mxu0 0.0
  %306 = vmatprep.subr.mxu0 0.0
  %307 = vmatpush2.msra.mxu0 0.0
  %308 = vmatprep.subr.mxu0 0.0
  %309 = vmatpush2.msra.mxu0 0.0
  %310 = vmatprep.subr.mxu0 0.0
  %311 = vmatpush2.msra.mxu0 0.0
  %312 = vmatprep.subr.mxu0 0.0
  %313 = vmatpush2.msra.mxu0 0.0
  %314 = vmatprep.subr.mxu0 0.0
  %315 = vmatpush2.msra.mxu0 0.0
  %316 = vmatprep.subr.mxu0 0.0
  %317 = vmatpush2.msra.mxu0 0.0
  %318 = vmatprep.subr.mxu0 0.0
  %319 = vmatpush2.msra.mxu0 %v269
  %320 = vmatprep.subr.mxu0 0.0
  %321 = vmatpush2.msra.mxu0 %v268
  %322 = vmatprep.subr.mxu0 0.0
  %323 = vmatpush2.msra.mxu0 %v267
  %324 = vmatprep.subr.mxu0 0.0
  %325 = vmatpush2.msra.mxu0 %v266
  %326 = vmatprep.subr.mxu0 0.0
  %327 = vmatpush2.msra.mxu0 %v265
  %328 = vmatprep.subr.mxu0 0.0
  %329 = vmatpush2.msra.mxu0 %v264
  %330 = vmatprep.subr.mxu0 0.0
  %331 = vmatpush2.msra.mxu0 %v263
  %332 = vmatprep.subr.mxu0 0.0
  %333 = vmatpush2.msra.mxu0 %v262
  %334 = vmatprep.mubr.f32.mxu0 %v63
  %335 = vmatmul.mubr.f32.gmra.mxu0 %v29
  %v336 = vpop.f32.mrf.mxu0
  %v337 = vadd.f32 0.0, %v336
  %v338 = vpop.f32.mrf.mxu0
  %339 = vmatprep.mubr.f32.mxu0 %v66
  %340 = vmatmul.mubr.f32.gmra.mxu0 %v31
  %v341 = vpop.f32.mrf.mxu0
  %v342 = vadd.f32 0.0, %v341
  %v343 = vpop.f32.mrf.mxu0
  %344 = vmatprep.mubr.f32.mxu0 %v69
  %345 = vmatmul.mubr.f32.gmra.mxu0 %v33
  %v346 = vpop.f32.mrf.mxu0
  %v347 = vadd.f32 0.0, %v346
  %v348 = vpop.f32.mrf.mxu0
  %349 = vmatprep.mubr.f32.mxu0 %v72
  %350 = vmatmul.mubr.f32.gmra.mxu0 %v35
  %v351 = vpop.f32.mrf.mxu0
  %v352 = vadd.f32 0.0, %v351
  %v353 = vpop.f32.mrf.mxu0
  %354 = vdwg.mxu0
  %v355 = vld [vmem:[%s5] sm:$0xff]
  %v357 = vsel %vm161, %v355, 0
  %359 = vmatprep.subr.mxu0 0.0
  %360 = vmatpush1.msra.mxu0 0.0
  %361 = vmatprep.subr.mxu0 0.0
  %362 = vmatpush1.msra.mxu0 0.0
  %363 = vmatprep.subr.mxu0 0.0
  %364 = vmatpush1.msra.mxu0 0.0
  %365 = vmatprep.subr.mxu0 0.0
  %366 = vmatpush1.msra.mxu0 0.0
  %367 = vmatprep.subr.mxu0 0.0
  %368 = vmatpush1.msra.mxu0 0.0
  %369 = vmatprep.subr.mxu0 0.0
  %370 = vmatpush1.msra.mxu0 0.0
  %371 = vmatprep.subr.mxu0 0.0
  %372 = vmatpush1.msra.mxu0 0.0
  %373 = vmatprep.subr.mxu0 0.0
  %374 = vmatpush1.msra.mxu0 0.0
  %375 = vmatprep.subr.mxu0 0.0
  %376 = vmatpush1.msra.mxu0 0.0
  %377 = vmatprep.subr.mxu0 0.0
  %378 = vmatpush1.msra.mxu0 0.0
  %379 = vmatprep.subr.mxu0 0.0
  %380 = vmatpush1.msra.mxu0 0.0
  %381 = vmatprep.subr.mxu0 0.0
  %382 = vmatpush1.msra.mxu0 0.0
  %383 = vmatprep.subr.mxu0 0.0
  %384 = vmatpush1.msra.mxu0 %v352
  %385 = vmatprep.subr.mxu0 0.0
  %386 = vmatpush1.msra.mxu0 %v347
  %387 = vmatprep.subr.mxu0 0.0
  %388 = vmatpush1.msra.mxu0 %v342
  %389 = vmatprep.subr.mxu0 0.0
  %390 = vmatpush1.msra.mxu0 %v337
  %391 = vmatprep.subr.mxu0 0.0
  %392 = vmatpush2.msra.mxu0 0.0
  %393 = vmatprep.subr.mxu0 0.0
  %394 = vmatpush2.msra.mxu0 0.0
  %395 = vmatprep.subr.mxu0 0.0
  %396 = vmatpush2.msra.mxu0 0.0
  %397 = vmatprep.subr.mxu0 0.0
  %398 = vmatpush2.msra.mxu0 0.0
  %399 = vmatprep.subr.mxu0 0.0
  %400 = vmatpush2.msra.mxu0 0.0
  %401 = vmatprep.subr.mxu0 0.0
  %402 = vmatpush2.msra.mxu0 0.0
  %403 = vmatprep.subr.mxu0 0.0
  %404 = vmatpush2.msra.mxu0 0.0
  %405 = vmatprep.subr.mxu0 0.0
  %406 = vmatpush2.msra.mxu0 0.0
  %407 = vmatprep.subr.mxu0 0.0
  %408 = vmatpush2.msra.mxu0 0.0
  %409 = vmatprep.subr.mxu0 0.0
  %410 = vmatpush2.msra.mxu0 0.0
  %411 = vmatprep.subr.mxu0 0.0
  %412 = vmatpush2.msra.mxu0 0.0
  %413 = vmatprep.subr.mxu0 0.0
  %414 = vmatpush2.msra.mxu0 0.0
  %415 = vmatprep.subr.mxu0 0.0
  %416 = vmatpush2.msra.mxu0 0.0
  %417 = vmatprep.subr.mxu0 0.0
  %418 = vmatpush2.msra.mxu0 0.0
  %419 = vmatprep.subr.mxu0 0.0
  %420 = vmatpush2.msra.mxu0 0.0
  %421 = vmatprep.subr.mxu0 0.0
  %422 = vmatpush2.msra.mxu0 0.0
  %423 = vmatprep.mubr.f32.mxu0 0.0
  %424 = vmatmul.mubr.f32.gmra.mxu0 %v357
  %v425 = vpop.f32.mrf.mxu0
  %v426 = vadd.f32 0.0, %v425
  %v427 = vpop.f32.mrf.mxu0
  %428 = vdwg.mxu0
  %vm429 = vcmask 392192
  %430 = vst.msk [vmem:[%s8] sm:$0xff] %vm429, %v426
  %v431 = vld [vmem:[%s3] sm:$0xff]
  %v432 = vld [vmem:[%s3 + $0x8] sm:$0xff]
  %v433 = vld [vmem:[%s3 + $0x10] sm:$0xff]
  %v434 = vld [vmem:[%s3 + $0x18] sm:$0xff]
  %v435 = vld [vmem:[%s3 + $0x20] sm:$0xff]
  %v436 = vld [vmem:[%s3 + $0x28] sm:$0xff]
  %v437 = vld [vmem:[%s3 + $0x30] sm:$0xff]
  %v438 = vld [vmem:[%s3 + $0x38] sm:$0xff]
  %v439 = vld [vmem:[%s3 + $0x40] sm:$0xff]
  %v440 = vld [vmem:[%s3 + $0x48] sm:$0xff]
  %v441 = vld [vmem:[%s3 + $0x50] sm:$0xff]
  %v442 = vld [vmem:[%s3 + $0x58] sm:$0xff]
  %v443 = vld [vmem:[%s3 + $0x60] sm:$0xff]
  %v444 = vld [vmem:[%s3 + $0x68] sm:$0xff]
  %v445 = vld [vmem:[%s3 + $0x70] sm:$0xff]
  %v446 = vld [vmem:[%s3 + $0x78] sm:$0xff]
  %v447 = vld [vmem:[%s3 + $0x80] sm:$0xff]
  %v448 = vld [vmem:[%s3 + $0x88] sm:$0xff]
  %v449 = vld [vmem:[%s3 + $0x90] sm:$0xff]
  %v450 = vld [vmem:[%s3 + $0x98] sm:$0xff]
  %v451 = vld [vmem:[%s3 + $0xa0] sm:$0xff]
  %v452 = vld [vmem:[%s3 + $0xa8] sm:$0xff]
  %v453 = vld [vmem:[%s3 + $0xb0] sm:$0xff]
  %v454 = vld [vmem:[%s3 + $0xb8] sm:$0xff]
  %455 = vmatprep.subr.mxu0 0.0
  %456 = vmatpush1.msra.mxu0 %v446
  %457 = vmatprep.subr.mxu0 0.0
  %458 = vmatpush1.msra.mxu0 %v445
  %459 = vmatprep.subr.mxu0 0.0
  %460 = vmatpush1.msra.mxu0 %v444
  %461 = vmatprep.subr.mxu0 0.0
  %462 = vmatpush1.msra.mxu0 %v443
  %463 = vmatprep.subr.mxu0 0.0
  %464 = vmatpush1.msra.mxu0 %v442
  %465 = vmatprep.subr.mxu0 0.0
  %466 = vmatpush1.msra.mxu0 %v441
  %467 = vmatprep.subr.mxu0 0.0
  %468 = vmatpush1.msra.mxu0 %v440
  %469 = vmatprep.subr.mxu0 0.0
  %470 = vmatpush1.msra.mxu0 %v439
  %471 = vmatprep.subr.mxu0 0.0
  %472 = vmatpush1.msra.mxu0 %v438
  %473 = vmatprep.subr.mxu0 0.0
  %474 = vmatpush1.msra.mxu0 %v437
  %475 = vmatprep.subr.mxu0 0.0
  %476 = vmatpush1.msra.mxu0 %v436
  %477 = vmatprep.subr.mxu0 0.0
  %478 = vmatpush1.msra.mxu0 %v435
  %479 = vmatprep.subr.mxu0 0.0
  %480 = vmatpush1.msra.mxu0 %v434
  %481 = vmatprep.subr.mxu0 0.0
  %482 = vmatpush1.msra.mxu0 %v433
  %483 = vmatprep.subr.mxu0 0.0
  %484 = vmatpush1.msra.mxu0 %v432
  %485 = vmatprep.subr.mxu0 0.0
  %486 = vmatpush1.msra.mxu0 %v431
  %487 = vmatprep.subr.mxu0 0.0
  %488 = vmatpush2.msra.mxu0 0.0
  %489 = vmatprep.subr.mxu0 0.0
  %490 = vmatpush2.msra.mxu0 0.0
  %491 = vmatprep.subr.mxu0 0.0
  %492 = vmatpush2.msra.mxu0 0.0
  %493 = vmatprep.subr.mxu0 0.0
  %494 = vmatpush2.msra.mxu0 0.0
  %495 = vmatprep.subr.mxu0 0.0
  %496 = vmatpush2.msra.mxu0 0.0
  %497 = vmatprep.subr.mxu0 0.0
  %498 = vmatpush2.msra.mxu0 0.0
  %499 = vmatprep.subr.mxu0 0.0
  %500 = vmatpush2.msra.mxu0 0.0
  %501 = vmatprep.subr.mxu0 0.0
  %502 = vmatpush2.msra.mxu0 0.0
  %503 = vmatprep.subr.mxu0 0.0
  %504 = vmatpush2.msra.mxu0 %v454
  %505 = vmatprep.subr.mxu0 0.0
  %506 = vmatpush2.msra.mxu0 %v453
  %507 = vmatprep.subr.mxu0 0.0
  %508 = vmatpush2.msra.mxu0 %v452
  %509 = vmatprep.subr.mxu0 0.0
  %510 = vmatpush2.msra.mxu0 %v451
  %511 = vmatprep.subr.mxu0 0.0
  %512 = vmatpush2.msra.mxu0 %v450
  %513 = vmatprep.subr.mxu0 0.0
  %514 = vmatpush2.msra.mxu0 %v449
  %515 = vmatprep.subr.mxu0 0.0
  %516 = vmatpush2.msra.mxu0 %v448
  %517 = vmatprep.subr.mxu0 0.0
  %518 = vmatpush2.msra.mxu0 %v447
  %519 = vmatprep.mubr.f32.mxu0 %v63
  %520 = vmatmul.mubr.f32.gmra.mxu0 %v29
  %v521 = vpop.f32.mrf.mxu0
  %v522 = vadd.f32 0.0, %v521
  %v523 = vpop.f32.mrf.mxu0
  %524 = vmatprep.mubr.f32.mxu0 %v66
  %525 = vmatmul.mubr.f32.gmra.mxu0 %v31
  %v526 = vpop.f32.mrf.mxu0
  %v527 = vadd.f32 0.0, %v526
  %v528 = vpop.f32.mrf.mxu0
  %529 = vmatprep.mubr.f32.mxu0 %v69
  %530 = vmatmul.mubr.f32.gmra.mxu0 %v33
  %v531 = vpop.f32.mrf.mxu0
  %v532 = vadd.f32 0.0, %v531
  %v533 = vpop.f32.mrf.mxu0
  %534 = vmatprep.mubr.f32.mxu0 %v72
  %535 = vmatmul.mubr.f32.gmra.mxu0 %v35
  %v536 = vpop.f32.mrf.mxu0
  %v537 = vadd.f32 0.0, %v536
  %v538 = vpop.f32.mrf.mxu0
  %539 = vdwg.mxu0
  %v540 = vld [vmem:[%s6] sm:$0xf]
  %v542 = vsel %vm161, %v540, 0
  %544 = vmatprep.subr.mxu0 0.0
  %545 = vmatpush1.msra.mxu0 0.0
  %546 = vmatprep.subr.mxu0 0.0
  %547 = vmatpush1.msra.mxu0 0.0
  %548 = vmatprep.subr.mxu0 0.0
  %549 = vmatpush1.msra.mxu0 0.0
  %550 = vmatprep.subr.mxu0 0.0
  %551 = vmatpush1.msra.mxu0 0.0
  %552 = vmatprep.subr.mxu0 0.0
  %553 = vmatpush1.msra.mxu0 0.0
  %554 = vmatprep.subr.mxu0 0.0
  %555 = vmatpush1.msra.mxu0 0.0
  %556 = vmatprep.subr.mxu0 0.0
  %557 = vmatpush1.msra.mxu0 0.0
  %558 = vmatprep.subr.mxu0 0.0
  %559 = vmatpush1.msra.mxu0 0.0
  %560 = vmatprep.subr.mxu0 0.0
  %561 = vmatpush1.msra.mxu0 0.0
  %562 = vmatprep.subr.mxu0 0.0
  %563 = vmatpush1.msra.mxu0 0.0
  %564 = vmatprep.subr.mxu0 0.0
  %565 = vmatpush1.msra.mxu0 0.0
  %566 = vmatprep.subr.mxu0 0.0
  %567 = vmatpush1.msra.mxu0 0.0
  %568 = vmatprep.subr.mxu0 0.0
  %569 = vmatpush1.msra.mxu0 %v537
  %570 = vmatprep.subr.mxu0 0.0
  %571 = vmatpush1.msra.mxu0 %v532
  %572 = vmatprep.subr.mxu0 0.0
  %573 = vmatpush1.msra.mxu0 %v527
  %574 = vmatprep.subr.mxu0 0.0
  %575 = vmatpush1.msra.mxu0 %v522
  %576 = vmatprep.subr.mxu0 0.0
  %577 = vmatpush2.msra.mxu0 0.0
  %578 = vmatprep.subr.mxu0 0.0
  %579 = vmatpush2.msra.mxu0 0.0
  %580 = vmatprep.subr.mxu0 0.0
  %581 = vmatpush2.msra.mxu0 0.0
  %582 = vmatprep.subr.mxu0 0.0
  %583 = vmatpush2.msra.mxu0 0.0
  %584 = vmatprep.subr.mxu0 0.0
  %585 = vmatpush2.msra.mxu0 0.0
  %586 = vmatprep.subr.mxu0 0.0
  %587 = vmatpush2.msra.mxu0 0.0
  %588 = vmatprep.subr.mxu0 0.0
  %589 = vmatpush2.msra.mxu0 0.0
  %590 = vmatprep.subr.mxu0 0.0
  %591 = vmatpush2.msra.mxu0 0.0
  %592 = vmatprep.subr.mxu0 0.0
  %593 = vmatpush2.msra.mxu0 0.0
  %594 = vmatprep.subr.mxu0 0.0
  %595 = vmatpush2.msra.mxu0 0.0
  %596 = vmatprep.subr.mxu0 0.0
  %597 = vmatpush2.msra.mxu0 0.0
  %598 = vmatprep.subr.mxu0 0.0
  %599 = vmatpush2.msra.mxu0 0.0
  %600 = vmatprep.subr.mxu0 0.0
  %601 = vmatpush2.msra.mxu0 0.0
  %602 = vmatprep.subr.mxu0 0.0
  %603 = vmatpush2.msra.mxu0 0.0
  %604 = vmatprep.subr.mxu0 0.0
  %605 = vmatpush2.msra.mxu0 0.0
  %606 = vmatprep.subr.mxu0 0.0
  %607 = vmatpush2.msra.mxu0 0.0
  %608 = vmatprep.mubr.f32.mxu0 0.0
  %609 = vmatmul.mubr.f32.gmra.mxu0 %v542
  %v610 = vpop.f32.mrf.mxu0
  %v611 = vadd.f32 0.0, %v610
  %v612 = vpop.f32.mrf.mxu0
  %613 = vdwg.mxu0
  %vm614 = vcmask 191488
  %615 = vst.msk [vmem:[%s9] sm:$0xf] %vm614, %v611
  // Predicated region
  $region30: #{forward.1} parent=0 // pred_check
    _
  $region31: #{forward.1} parent=0 // pred_check_branch
    %617 = sbr.rel (0) target = $region33
  $region32: #{forward.1} parent=0 // pred_region
    _
  $region33: #{forward.1} parent=0 // pred_fallthru
    _
  // Predicated region
  $region34: #{forward.1} parent=0 // pred_check
    _
  $region35: #{forward.1} parent=0 // pred_check_branch
    %619 = sbr.rel (0) target = $region37
  $region36: #{forward.1} parent=0 // pred_region
    _
  $region37: #{forward.1} parent=0 // pred_fallthru
    _
  // Predicated region
  $region38: #{forward.1} parent=0 // pred_check
    _
  $region39: #{forward.1} parent=0 // pred_check_branch
    %621 = sbr.rel (0) target = $region41
  $region40: #{forward.1} parent=0 // pred_region
    _
  $region41: #{forward.1} parent=0 // pred_fallthru
    _
  // Predicated region
  $region42: #{forward.1} parent=0 // pred_check
    _
  $region43: #{forward.1} parent=0 // pred_check_branch
    %623 = sbr.rel (0) target = $region45
  $region44: #{forward.1} parent=0 // pred_region
    _
  $region45: #{forward.1} parent=0 // pred_fallthru
    _
  // Predicated region
  $region46: #{forward.1} parent=0 // pred_check
    _
  $region47: #{forward.1} parent=0 // pred_check_branch
    %625 = sbr.rel (0) target = $region49
  $region48: #{forward.1} parent=0 // pred_region
    _
  $region49: #{forward.1} parent=0 // pred_fallthru
    _
  // Predicated region
  $region50: #{forward.1} parent=0 // pred_check
    _
  $region51: #{forward.1} parent=0 // pred_check_branch
    %627 = sbr.rel (0) target = $region53
  $region52: #{forward.1} parent=0 // pred_region
    _
  $region53: #{forward.1} parent=0 // pred_fallthru
    _

</llo_original>
